<compile_context>
chip_gen: v5e
topology: v5e:2x2
jax: 0.10.0
libtpu: 0.0.40
codegen_flags: <defaults>
</compile_context>

<pallas_src>
import functools

import jax
import jax.numpy as jnp
from jax import lax
from jax.experimental import pallas as pl
from jax.experimental.pallas import tpu as pltpu

_LANE = 128
_NEG = -1e30  # masked-lane logit; exp(_NEG - max) underflows to exactly 0 in f32


def _round_up(v, m):
    return (v + m - 1) // m * m


def _pack_layout(widths, lane=_LANE):
    """Greedy dense packing of head widths into 128-lane segments.

    Returns:
      segments: tuple of (seg_off, seg_width, ((off_in_seg, n), ...)) — static.
      head_abs: tuple of (abs_lane_off, n) per head, in original order.
      total_p:  total packed lane width (multiple of 128).
    """
    segments = []
    head_abs = []
    next_off = 0
    open_seg = None  # [seg_off, fill, [(off_in_seg, n), ...]]

    def _flush():
        nonlocal open_seg
        if open_seg is not None:
            segments.append((open_seg[0], lane, tuple(open_seg[2])))
            open_seg = None

    for n in widths:
        n = int(n)
        if n >= lane:
            _flush()
            w = _round_up(n, lane)
            segments.append((next_off, w, ((0, n),)))
            head_abs.append((next_off, n))
            next_off += w
        else:
            if open_seg is None or open_seg[1] + n > lane:
                _flush()
                open_seg = [next_off, 0, []]
                next_off += lane
            open_seg[2].append((open_seg[1], n))
            head_abs.append((open_seg[0] + open_seg[1], n))
            open_seg[1] += n
    _flush()
    return tuple(segments), tuple(head_abs), next_off


def pack_perceiver_head_params(weights, biases, *, mxu_dtype=jnp.bfloat16):
    """Pack per-head (C, n_i) / (n_i,) params into one lane-dense slab.

    Call ONCE at init (hoisted out of the forward path).  `mxu_dtype=None`
    keeps the weights' native dtype; bf16 is the native MXU dtype.
    """
    C = weights[0].shape[0]
    widths = tuple(int(w.shape[1]) for w in weights)
    segments, head_abs, total_p = _pack_layout(widths)

    w_dtype = mxu_dtype if mxu_dtype is not None else weights[0].dtype
    w_cat = jnp.zeros((C, total_p), dtype=w_dtype)
    b_cat = jnp.zeros((1, total_p), dtype=jnp.float32)
    for (off, n), w, b in zip(head_abs, weights, biases):
        w_cat = w_cat.at[:, off:off + n].set(w.astype(w_dtype))
        b_cat = b_cat.at[:, off:off + n].set(b.astype(jnp.float32)[None, :])
    layout = (segments, head_abs, total_p)
    return w_cat, b_cat, layout


def _perceiver_head_kernel(x_ref, w_ref, b_ref, o_ref, *, segments,
                           apply_softmax, approx_reciprocal):
    """Fused multi-head linear + bias (+ per-head masked softmax) for one row tile.

    x_ref: (tile_n, C)      VMEM (native dtype; cast to MXU dtype in-kernel)
    w_ref: (C, P)           VMEM (all heads packed; resident across the grid)
    b_ref: (1, P)           VMEM f32 (resident)
    o_ref: (tile_n, P)      VMEM (bf16 by default; lane-dense 128-aligned stores)
    """
    x = x_ref[...]
    w = w_ref[...]
    if x.dtype != w.dtype:
        x = x.astype(w.dtype)  # bf16 MXU operands; f32 accumulation below
    logits = jnp.dot(x, w, preferred_element_type=jnp.float32) + b_ref[...]

    if not apply_softmax:
        o_ref[...] = logits.astype(o_ref.dtype)
        return

    for seg_off, seg_width, heads in segments:
        seg = logits[:, seg_off:seg_off + seg_width]  # static 128-aligned slice
        if len(heads) == 1 and heads[0][1] == seg_width:
            # Head fills the whole segment: plain softmax, no masking needed.
            m = jnp.max(seg, axis=-1, keepdims=True)
            e = jnp.exp(seg - m)
            denom = jnp.sum(e, axis=-1, keepdims=True)
            out_seg = e * pl.reciprocal(denom, approx=approx_reciprocal)
        else:
            # Several heads (and/or padding) share this 128-lane segment:
            # per-head masked softmax via lane-index masks.
            lane = lax.broadcasted_iota(jnp.int32, (1, seg_width), 1)
            out_seg = jnp.zeros_like(seg)
            for off, n in heads:
                mask = jnp.logical_and(lane >= off, lane < off + n)
                masked = jnp.where(mask, seg, _NEG)
                m = jnp.max(masked, axis=-1, keepdims=True)
                e = jnp.exp(masked - m)  # masked lanes underflow to exactly 0
                denom = jnp.sum(e, axis=-1, keepdims=True)
                probs = e * pl.reciprocal(denom, approx=approx_reciprocal)
                out_seg = jnp.where(mask, probs, out_seg)
        o_ref[:, seg_off:seg_off + seg_width] = out_seg.astype(o_ref.dtype)


def perceiver_head_forward(x, w_cat, b_cat, layout, *, training=False,
                           test_noact=False, out_dtype=jnp.bfloat16,
                           approx_reciprocal=False, tile_n=None):
    """JAX/Pallas equivalent of PerceiverHead.forward (act_func='softmax').

    x: (N, C) with C == sum(dim_in); (w_cat, b_cat, layout) from
    pack_perceiver_head_params.  Returns a list of (N, n_i) arrays.
    """
    segments, head_abs, total_p = layout
    N, C = x.shape
    apply_softmax = (not training) and (not test_noact)

    in_bytes = jnp.dtype(x.dtype).itemsize
    out_bytes = jnp.dtype(out_dtype).itemsize
    w_bytes = w_cat.size * jnp.dtype(w_cat.dtype).itemsize
    b_bytes = b_cat.size * 4

    def _per_step_bytes(t):
        # double-buffered x / out tiles + f32 logits + temporaries headroom
        return 2 * t * (C * in_bytes + total_p * out_bytes) + 4 * t * total_p * 4

    if tile_n is None:
        tile_n = min(512, _round_up(max(N, 1), 8))
        # Keep the per-step VMEM footprint small enough for v5e's 16 MiB scoped
        # default and v7x's 64 MiB physical VMEM, while preferring >=512 rows.
        budget = 12 << 20
        while tile_n > 8 and _per_step_bytes(tile_n) + w_bytes + b_bytes > budget:
            tile_n //= 2
    tile_n = max(8, (int(tile_n) // 8) * 8)

    n_pad = _round_up(N, tile_n)
    if n_pad != N:
        x = jnp.pad(x, ((0, n_pad - N), (0, 0)))  # padded rows are sliced off below

    grid = (n_pad // tile_n,)
    vmem_limit = int(min(
        2 * (_per_step_bytes(tile_n) + w_bytes + b_bytes) + (2 << 20),
        100 << 20))

    kernel = functools.partial(
        _perceiver_head_kernel,
        segments=segments,
        apply_softmax=apply_softmax,
        approx_reciprocal=approx_reciprocal)

    cost = pl.CostEstimate(
        flops=2 * n_pad * C * total_p + 8 * n_pad * total_p,
        transcendentals=(n_pad * total_p) if apply_softmax else 0,
        bytes_accessed=(n_pad * C * in_bytes + w_bytes + b_bytes
                        + n_pad * total_p * out_bytes),
    )

    out = pl.pallas_call(
        kernel,
        out_shape=jax.ShapeDtypeStruct((n_pad, total_p), out_dtype),
        grid=grid,
        in_specs=[
            pl.BlockSpec((tile_n, C), lambda i: (i, 0)),       # pipelined rows
            pl.BlockSpec((C, total_p), lambda i: (0, 0)),      # resident weights
            pl.BlockSpec((1, total_p), lambda i: (0, 0)),      # resident biases
        ],
        out_specs=pl.BlockSpec((tile_n, total_p), lambda i: (i, 0)),
        compiler_params=pltpu.CompilerParams(
            dimension_semantics=("parallel",),   # megacore sharding on v7x
            vmem_limit_bytes=vmem_limit),
        cost_estimate=cost,
    )(x, w_cat, b_cat)

    # torch's mean over singleton dims [1,2,3] and view(N,-1) are no-ops here;
    # slicing off the row padding + lane packing recovers each (N, n_i) result.
    return [out[:N, off:off + n] for off, n in head_abs]


def _reference(x, weights, biases, training=False, test_noact=False):
    outs = []
    for w, b in zip(weights, biases):
        y = jnp.dot(x.astype(jnp.float32), w.astype(jnp.float32),
                    precision=lax.Precision.HIGHEST) + b.astype(jnp.float32)
        if (not training) and (not test_noact):
            y = jax.nn.softmax(y, axis=-1)
        outs.append(y)
    return outs


if __name__ == "__main__":
    # Module config: dim_in = [16, 16] -> C = 32, num_classes = (16, 8).
    N = 8
    dim_in = (16, 16)
    C = sum(dim_in)
    num_classes = (16, 8)

    key = jax.random.PRNGKey(0)
    kx, *kps = jax.random.split(key, 1 + 2 * len(num_classes))
    x = jax.random.normal(kx, (N, C), dtype=jnp.float32)

    weights, biases = [], []
    for i, n in enumerate(num_classes):
        kw, kb = kps[2 * i], kps[2 * i + 1]
        # torch.nn.Linear weight is (n, C); stored transposed as (C, n).
        w = jax.random.normal(kw, (C, n), dtype=jnp.float32) / jnp.sqrt(C)
        b = jax.random.normal(kb, (n,), dtype=jnp.float32) * 0.01
        weights.append(w)
        biases.append(b)

    refs = _reference(x, weights, biases)
    refs_noact = _reference(x, weights, biases, test_noact=True)

    # 1) Accuracy-checking config: f32 MXU operands, f32 output, exact divide.
    w32, b32, layout32 = pack_perceiver_head_params(weights, biases,
                                                    mxu_dtype=None)
    outs = perceiver_head_forward(x, w32, b32, layout32,
                                  out_dtype=jnp.float32,
                                  approx_reciprocal=False)
    outs = [jax.block_until_ready(o) for o in outs]
    for o, r, n in zip(outs, refs, num_classes):
        assert o.shape == (N, n), (o.shape, (N, n))
        assert jnp.allclose(o, r, atol=2e-3, rtol=2e-3), \
            "softmax mismatch (f32 path)"

    # No-activation path (training / test_noact): raw logits per head.
    outs_na = perceiver_head_forward(x, w32, b32, layout32, test_noact=True,
                                     out_dtype=jnp.float32)
    outs_na = [jax.block_until_ready(o) for o in outs_na]
    for o, r in zip(outs_na, refs_noact):
        assert jnp.allclose(o, r, atol=1e-2, rtol=1e-2), \
            "logit mismatch (no-act path)"

    # 2) Production config: bf16 MXU operands + bf16 writeback (f32 softmax math).
    wbf, bbf, layoutbf = pack_perceiver_head_params(weights, biases,
                                                    mxu_dtype=jnp.bfloat16)
    outs_bf = perceiver_head_forward(x, wbf, bbf, layoutbf,
                                     out_dtype=jnp.bfloat16)
    outs_bf = [jax.block_until_ready(o) for o in outs_bf]
    for o, r, n in zip(outs_bf, refs, num_classes):
        assert o.shape == (N, n), (o.shape, (N, n))
        # bf16 operands/output: ~1e-2-level relative error vs f32 reference.
        assert jnp.allclose(o.astype(jnp.float32), r, atol=3e-2, rtol=3e-2), \
            "softmax mismatch (bf16 path)"

    print("KERNEL_OK")
</pallas_src>

<mosaic_0001>
module attributes {stable_mosaic.version = 11 : i64} {
  func.func @_perceiver_head_kernel(%arg0: i32, %arg1: memref<8x32xf32, #tpu.memory_space<vmem>>, %arg2: memref<32x128xf32, #tpu.memory_space<vmem>>, %arg3: memref<1x128xf32, #tpu.memory_space<vmem>>, %arg4: memref<8x128xf32, #tpu.memory_space<vmem>>) attributes {dimension_semantics = [#tpu.dimension_semantics<parallel>], iteration_bounds = array<i64: 1>, scalar_prefetch = 0 : i64, scratch_operands = 0 : i64, tpu.core_type = #tpu.core_type<tc>, window_params = [{transform_indices = @transform_0, window_bounds = array<i64: 8, 32>}, {pipeline_mode = #tpu.pipeline_mode<synchronous>, transform_indices = @transform_1, window_bounds = array<i64: 32, 128>}, {pipeline_mode = #tpu.pipeline_mode<synchronous>, transform_indices = @transform_2, window_bounds = array<i64: 1, 128>}, {transform_indices = @transform_3, window_bounds = array<i64: 8, 128>}]} {
    %c0 = arith.constant 0 : index
    %c0_0 = arith.constant 0 : index
    %0 = vector.load %arg1[%c0, %c0_0] : memref<8x32xf32, #tpu.memory_space<vmem>>, vector<8x32xf32>
    %c0_1 = arith.constant 0 : index
    %c0_2 = arith.constant 0 : index
    %1 = vector.load %arg2[%c0_1, %c0_2] : memref<32x128xf32, #tpu.memory_space<vmem>>, vector<32x128xf32>
    %cst = arith.constant dense<0.000000e+00> : vector<8x128xf32>
    %2 = tpu.matmul %0, %1, %cst {dimension_numbers = #tpu.dot_dimension_numbers<[1], [0], [0], [1], [0, 0, 1, 1], [], []>} : vector<8x32xf32>, vector<32x128xf32>, vector<8x128xf32> -> vector<8x128xf32>
    %c0_3 = arith.constant 0 : index
    %c0_4 = arith.constant 0 : index
    %3 = vector.load %arg3[%c0_3, %c0_4] : memref<1x128xf32, #tpu.memory_space<vmem>>, vector<1x128xf32>
    %4 = vector.broadcast %3 : vector<1x128xf32> to vector<8x128xf32>
    %5 = arith.addf %2, %4 : vector<8x128xf32>
    %6 = tpu.iota {dimensions = array<i32: 1>} : vector<1x128xi32>
    %cst_5 = arith.constant 0.000000e+00 : f32
    %7 = vector.broadcast %cst_5 : f32 to vector<8x128xf32>
    %c0_i32 = arith.constant 0 : i32
    %8 = vector.broadcast %c0_i32 : i32 to vector<1x128xi32>
    %9 = arith.cmpi sge, %6, %8 : vector<1x128xi32>
    %c16_i32 = arith.constant 16 : i32
    %10 = vector.broadcast %c16_i32 : i32 to vector<1x128xi32>
    %11 = arith.cmpi slt, %6, %10 : vector<1x128xi32>
    %12 = arith.andi %9, %11 : vector<1x128xi1>
    %cst_6 = arith.constant -1.000000e+30 : f32
    %13 = vector.shape_cast %12 : vector<1x128xi1> to vector<1x128xi1>
    %14 = vector.broadcast %13 : vector<1x128xi1> to vector<8x128xi1>
    %15 = vector.broadcast %cst_6 : f32 to vector<8x128xf32>
    %16 = arith.select %14, %5, %15 : vector<8x128xi1>, vector<8x128xf32>
    %cst_7 = arith.constant dense<0xFF800000> : vector<8xf32>
    %17 = vector.multi_reduction <maximumf>, %16, %cst_7 [1] : vector<8x128xf32> to vector<8xf32>
    %18 = vector.shape_cast %17 : vector<8xf32> to vector<8x1xf32>
    %19 = vector.broadcast %18 : vector<8x1xf32> to vector<8x128xf32>
    %20 = arith.subf %16, %19 : vector<8x128xf32>
    %21 = math.exp %20 : vector<8x128xf32>
    %cst_8 = arith.constant dense<0.000000e+00> : vector<8xf32>
    %22 = vector.multi_reduction <add>, %21, %cst_8 [1] : vector<8x128xf32> to vector<8xf32>
    %23 = vector.shape_cast %22 : vector<8xf32> to vector<8x1xf32>
    %24 = tpu.reciprocal %23 : vector<8x1xf32> -> vector<8x1xf32>
    %25 = vector.broadcast %24 : vector<8x1xf32> to vector<8x128xf32>
    %26 = arith.mulf %21, %25 : vector<8x128xf32>
    %27 = vector.shape_cast %12 : vector<1x128xi1> to vector<1x128xi1>
    %28 = vector.broadcast %27 : vector<1x128xi1> to vector<8x128xi1>
    %29 = arith.select %28, %26, %7 : vector<8x128xi1>, vector<8x128xf32>
    %c16_i32_9 = arith.constant 16 : i32
    %30 = vector.broadcast %c16_i32_9 : i32 to vector<1x128xi32>
    %31 = arith.cmpi sge, %6, %30 : vector<1x128xi32>
    %c24_i32 = arith.constant 24 : i32
    %32 = vector.broadcast %c24_i32 : i32 to vector<1x128xi32>
    %33 = arith.cmpi slt, %6, %32 : vector<1x128xi32>
    %34 = arith.andi %31, %33 : vector<1x128xi1>
    %cst_10 = arith.constant -1.000000e+30 : f32
    %35 = vector.shape_cast %34 : vector<1x128xi1> to vector<1x128xi1>
    %36 = vector.broadcast %35 : vector<1x128xi1> to vector<8x128xi1>
    %37 = vector.broadcast %cst_10 : f32 to vector<8x128xf32>
    %38 = arith.select %36, %5, %37 : vector<8x128xi1>, vector<8x128xf32>
    %cst_11 = arith.constant dense<0xFF800000> : vector<8xf32>
    %39 = vector.multi_reduction <maximumf>, %38, %cst_11 [1] : vector<8x128xf32> to vector<8xf32>
    %40 = vector.shape_cast %39 : vector<8xf32> to vector<8x1xf32>
    %41 = vector.broadcast %40 : vector<8x1xf32> to vector<8x128xf32>
    %42 = arith.subf %38, %41 : vector<8x128xf32>
    %43 = math.exp %42 : vector<8x128xf32>
    %cst_12 = arith.constant dense<0.000000e+00> : vector<8xf32>
    %44 = vector.multi_reduction <add>, %43, %cst_12 [1] : vector<8x128xf32> to vector<8xf32>
    %45 = vector.shape_cast %44 : vector<8xf32> to vector<8x1xf32>
    %46 = tpu.reciprocal %45 : vector<8x1xf32> -> vector<8x1xf32>
    %47 = vector.broadcast %46 : vector<8x1xf32> to vector<8x128xf32>
    %48 = arith.mulf %43, %47 : vector<8x128xf32>
    %49 = vector.shape_cast %34 : vector<1x128xi1> to vector<1x128xi1>
    %50 = vector.broadcast %49 : vector<1x128xi1> to vector<8x128xi1>
    %51 = arith.select %50, %48, %29 : vector<8x128xi1>, vector<8x128xf32>
    %c0_13 = arith.constant 0 : index
    %c0_14 = arith.constant 0 : index
    %52 = vector.load %arg4[%c0_13, %c0_14] : memref<8x128xf32, #tpu.memory_space<vmem>>, vector<8x128xf32>
    tpu.vector_store %arg4[%c0_13, %c0_14], %51 {strides = array<i32>} : memref<8x128xf32, #tpu.memory_space<vmem>>, vector<8x128xf32>,
    return
  }
  func.func @transform_0(%arg0: i32) -> (i32, i32) {
    %c0_i32 = arith.constant 0 : i32
    %c0_i32_0 = arith.constant 0 : i32
    return %arg0, %c0_i32 : i32, i32
  }
  func.func @transform_1(%arg0: i32) -> (i32, i32) {
    %c0_i32 = arith.constant 0 : i32
    %c0_i32_0 = arith.constant 0 : i32
    %c0_i32_1 = arith.constant 0 : i32
    return %c0_i32, %c0_i32_0 : i32, i32
  }
  func.func @transform_2(%arg0: i32) -> (i32, i32) {
    %c0_i32 = arith.constant 0 : i32
    %c0_i32_0 = arith.constant 0 : i32
    %c0_i32_1 = arith.constant 0 : i32
    return %c0_i32, %c0_i32_0 : i32, i32
  }
  func.func @transform_3(%arg0: i32) -> (i32, i32) {
    %c0_i32 = arith.constant 0 : i32
    %c0_i32_0 = arith.constant 0 : i32
    return %arg0, %c0_i32 : i32, i32
  }
}

</mosaic_0001>

<llo_original>
// kernel: tpu_custom_call.1
$region0: #{tpu_custom_call.1}
  #allocation0 [shape = 'u32[]', space=smem, size = 0x4, offset = 0x4, fixed_abs, tag = 'smem constant byte address 0x4 - core index']
  #allocation1 [shape = 'u32[72,128]{1,0:T(1,128)}', space=vmem, size = 0x9000, scoped, tag = 'internal scratch']
  %s0 = inlined_call_operand.hbm [shape: f32[8,32], index: 0, kind: input, shape index: {}]
  %s1 = inlined_call_operand.hbm [shape: f32[32,128], index: 1, kind: input, shape index: {}]
  %s2 = inlined_call_operand.vmem [shape: f32[1,128], index: 2, kind: input, shape index: {}]
  %s3 = inlined_call_operand.hbm [shape: f32[8,128], index: 3, kind: output, shape index: {}]
  %s4 = sld [smem:[#allocation0]]
  $region30: #{tpu_custom_call.1} parent=0
    _
  %s6 = ssub.s32 1, %s4
  %s7 = scalar_select 0, %s6, %s4
  $region1: #{tpu_custom_call.1} parent=0
    #allocation2 [shape = 'u8[4096]{0}', space=vmem, size = 0x1000, scoped, tag = 'input window, operand 0, single buffered']
    #allocation3 [shape = 's32[1]{0}', space=sflag, size = 0x4, scoped, tag = 'scoped memory for tpu_custom_call.1']
    #allocation4 [shape = 's32[1]{0}', space=sflag, size = 0x4, scoped, tag = 'scoped memory for tpu_custom_call.1']
    #allocation5 [shape = 'u8[16384]{0}', space=vmem, size = 0x4000, scoped, tag = 'input window, operand 1, single buffered']
    #allocation6 [shape = 's32[1]{0}', space=sflag, size = 0x4, scoped, tag = 'scoped memory for tpu_custom_call.1']
    #allocation7 [shape = 'u8[4096]{0}', space=vmem, size = 0x1000, scoped, tag = 'output window, operand 0, single buffered']
    %8 = vsyncpa [#allocation3], 0
    %9 = vsyncpa [#allocation6], 0
    %10 = vsyncpa [#allocation4], 0
    // Predicated region
    $region2: #{tpu_custom_call.1} parent=1 // pred_check
      _
    $region3: #{tpu_custom_call.1} parent=1 // pred_check_branch
      %12 = sbr.rel (0) target = $region5
    $region4: #{tpu_custom_call.1} parent=1 // pred_region
      %14 = vsyncadd [#allocation3], 0
      %s16 = sshll.u32 %s0, 4
      %s17 = int_to_ptr.hbm [resolvable:$true] %s16
      %s18 = sshll.u32 [#allocation2], 4
      %s19 = int_to_ptr.vmem [resolvable:$true] %s18
      %21 = dma.hbm_to_vmem [thread:$0]  %s17, 128, %s19, [#allocation3]
    $region5: #{tpu_custom_call.1} parent=1 // pred_fallthru
      _
    // Predicated region
    $region6: #{tpu_custom_call.1} parent=1 // pred_check
      _
    $region7: #{tpu_custom_call.1} parent=1 // pred_check_branch
      %23 = sbr.rel (0) target = $region9
    $region8: #{tpu_custom_call.1} parent=1 // pred_region
      %25 = vsyncadd [#allocation6], 0
      %s26 = sshll.u32 %s1, 4
      %s27 = int_to_ptr.hbm [resolvable:$true] %s26
      %s28 = sshll.u32 [#allocation5], 4
      %s29 = int_to_ptr.vmem [resolvable:$true] %s28
      %34 = dma.hbm_to_vmem [thread:$0]  %s27, 512, %s29, [#allocation6], 128, 128, 8
    $region9: #{tpu_custom_call.1} parent=1 // pred_fallthru
      _
    // Predicated region
    $region10: #{tpu_custom_call.1} parent=1 // pred_check
      _
    $region11: #{tpu_custom_call.1} parent=1 // pred_check_branch
      %36 = sbr.rel (0) target = $region13
    $region12: #{tpu_custom_call.1} parent=1 // pred_region
      _
    $region13: #{tpu_custom_call.1} parent=1 // pred_fallthru
      _
    // Predicated region
    $region14: #{tpu_custom_call.1} parent=1 // pred_check
      _
    $region15: #{tpu_custom_call.1} parent=1 // pred_check_branch
      %38 = sbr.rel (0) target = $region17
    $region16: #{tpu_custom_call.1} parent=1 // pred_region
      %40 = dma.done [#allocation3], 128
    $region17: #{tpu_custom_call.1} parent=1 // pred_fallthru
      _
    // Predicated region
    $region18: #{tpu_custom_call.1} parent=1 // pred_check
      _
    $region19: #{tpu_custom_call.1} parent=1 // pred_check_branch
      %42 = sbr.rel (0) target = $region21
    $region20: #{tpu_custom_call.1} parent=1 // pred_region
      %44 = dma.done [#allocation6], 512
    $region21: #{tpu_custom_call.1} parent=1 // pred_fallthru
      _
    %v45 = vld [vmem:[#allocation2] sm:$0xff]
    %v46 = vld [vmem:[#allocation5] sm:$0xff]
    %v47 = vld [vmem:[#allocation5 + $0x8] sm:$0xff]
    %v48 = vld [vmem:[#allocation5 + $0x10] sm:$0xff]
    %v49 = vld [vmem:[#allocation5 + $0x18] sm:$0xff]
    %v50 = vld [vmem:[%s2] sm:$0x1]
    %v52 = vperm.slane %v50, 0
    %vm54 = vcmask 261120
    %v56 = vsel %vm54, %v45, 0
    %58 = vmatpush.msra.mxu0 0.0
    %59 = vmatpush.msra.mxu0 0.0
    %60 = vmatpush.msra.mxu0 0.0
    %61 = vmatpush.msra.mxu0 0.0
    %62 = vmatpush.msra.mxu0 0.0
    %63 = vmatpush.msra.mxu0 0.0
    %64 = vmatpush.msra.mxu0 0.0
    %65 = vmatpush.msra.mxu0 0.0
    %66 = vmatpush.msra.mxu0 0.0
    %67 = vmatpush.msra.mxu0 0.0
    %68 = vmatpush.msra.mxu0 0.0
    %69 = vmatpush.msra.mxu0 0.0
    %70 = vmatpush.msra.mxu0 %v49
    %71 = vmatpush.msra.mxu0 %v48
    %72 = vmatpush.msra.mxu0 %v47
    %73 = vmatpush.msra.mxu0 %v46
    %74 = vmatmul.f32.gmra.mxu0 %v56
    %v75 = vpop.f32.mrf.mxu0
    %v76 = vadd.f32 %v52, %v75
    %77 = vdwg.mxu0
    %v78 = vlaneseq
    %v79 = vand.u32 %v78, 127
    %vm80 = vcmp.ge.s32.totalorder %v79, 0
    %vm81 = vcmp.lt.s32.totalorder %v79, 16
    %vm82 = vmand %vm80, %vm81
    %v83 = vsel %vm82, 1, 0
    %vm84 = vcmp.eq.s32.totalorder %v83, 1
    %v85 = vsel %vm84, %v76, -1e+30
    %86 = vmax.xlane.f32.xlu0 %v85
    %v87 = vpop.xlane.xlu0 %86
    %v88 = vsub.f32 %v85, %v87
    %v89 = vmul.f32 %v88, 1.442695
    %v90 = vpow.pop %v89
    %91 = vadd.xlane.f32.xlu0 %v90
    %v92 = vpop.xlane.xlu0 %91
    %v93 = vrcp.pop %v92
    %v94 = vmul.f32 %v92, %v93
    %v95 = vsub.f32 1.0, %v94
    %v96 = vmul.f32 %v93, %v95
    %v97 = vadd.f32 %v93, %v96
    %vm98 = vweird.f32 %v92
    %vm99 = vweird.f32 %v93
    %vm100 = vmor %vm98, %vm99
    %v101 = vsel %vm100, %v93, %v97
    %v102 = vand.u32 2147483647, %v92
    %vm103 = vcmp.eq.f32.partialorder %v102, 8.507059e+37
    %v104 = vand.u32 %v92, 2147483648
    %v105 = vor.u32 1.1754944e-38, %v104
    %v106 = vsel %vm103, %v105, %v101
    %v107 = vmul.f32 %v90, %v106
    %v108 = vsel %vm84, %v107, 0.0
    %vm109 = vcmp.ge.s32.totalorder %v79, 16
    %vm110 = vcmp.lt.s32.totalorder %v79, 24
    %vm111 = vmand %vm109, %vm110
    %v112 = vsel %vm111, 1, 0
    %vm113 = vcmp.eq.s32.totalorder %v112, 1
    %v114 = vsel %vm113, %v76, -1e+30
    %115 = vmax.xlane.f32.xlu0 %v114
    %v116 = vpop.xlane.xlu0 %115
    %v117 = vsub.f32 %v114, %v116
    %v118 = vmul.f32 %v117, 1.442695
    %v119 = vpow.pop %v118
    %120 = vadd.xlane.f32.xlu0 %v119
    %v121 = vpop.xlane.xlu0 %120
    %v122 = vrcp.pop %v121
    %v123 = vmul.f32 %v121, %v122
    %v124 = vsub.f32 1.0, %v123
    %v125 = vmul.f32 %v122, %v124
    %v126 = vadd.f32 %v122, %v125
    %vm127 = vweird.f32 %v121
    %vm128 = vweird.f32 %v122
    %vm129 = vmor %vm127, %vm128
    %v130 = vsel %vm129, %v122, %v126
    %v131 = vand.u32 2147483647, %v121
    %vm132 = vcmp.eq.f32.partialorder %v131, 8.507059e+37
    %v133 = vand.u32 %v121, 2147483648
    %v134 = vor.u32 1.1754944e-38, %v133
    %v135 = vsel %vm132, %v134, %v130
    %v136 = vmul.f32 %v119, %v135
    %v137 = vsel %vm113, %v136, %v108
    %138 = vst [vmem:[#allocation7] sm:$0xff] %v137
    // Predicated region
    $region22: #{tpu_custom_call.1} parent=1 // pred_check
      _
    $region23: #{tpu_custom_call.1} parent=1 // pred_check_branch
      %140 = sbr.rel (0) target = $region25
    $region24: #{tpu_custom_call.1} parent=1 // pred_region
      %142 = vsyncadd [#allocation4], 0
      %s144 = sshll.u32 [#allocation7], 4
      %s145 = int_to_ptr.vmem [resolvable:$true] %s144
      %s146 = sshll.u32 %s3, 4
      %s147 = int_to_ptr.hbm [resolvable:$true] %s146
      %149 = dma.vmem_to_hbm [thread:$0]  %s145, 128, %s147, [#allocation4]
    $region25: #{tpu_custom_call.1} parent=1 // pred_fallthru
      _
    // Predicated region
    $region26: #{tpu_custom_call.1} parent=1 // pred_check
      _
    $region27: #{tpu_custom_call.1} parent=1 // pred_check_branch
      %151 = sbr.rel (0) target = $region29
    $region28: #{tpu_custom_call.1} parent=1 // pred_region
      %153 = dma.done [#allocation4], 128
    $region29: #{tpu_custom_call.1} parent=1 // pred_fallthru
      _
    %154 = vsyncpa [#allocation3], 1
    %155 = vsyncpa [#allocation6], 1
    %156 = vsyncpa [#allocation4], 1

</llo_original>
